<compile_context>
chip_gen: v5e
topology: v5e:2x2
jax: 0.10.0
libtpu: 0.0.40
codegen_flags: <defaults>
</compile_context>

<pallas_src>
import jax
import jax.numpy as jnp
from jax.experimental import pallas as pl
from jax.experimental.pallas import tpu as pltpu


def _stochastic_depth_kernel(scale_ref, x_ref, o_ref):
    # scale_ref: (TILE_N, 1) f32 per-sample scale (1/p if kept, 0 if dropped)
    # x_ref/o_ref: (TILE_N, TILE_F) tiles of the flattened activation
    o_ref[...] = (x_ref[...] * scale_ref[...]).astype(o_ref.dtype)


def _round_up(x, m):
    return ((x + m - 1) // m) * m


def _largest_divisor(total, cap):
    """Largest d <= cap that divides total (total >= 1, cap >= 1)."""
    d = max(1, min(total, cap))
    while total % d:
        d -= 1
    return d


def stochastic_depth(x, key, *, survival_prob=0.8, training=True):
    """JAX/Pallas equivalent of StochasticDepth.forward (NCHW input)."""
    if not training:
        return x

    p = float(survival_prob)
    if p <= 0.0:
        # Every sample is dropped.
        # TODO(synk): PyTorch's x/0 * 0 yields NaN here; we return zeros instead.
        return jnp.zeros_like(x)

    N = x.shape[0]
    F = 1
    for d in x.shape[1:]:
        F *= d

    itemsize = jnp.dtype(x.dtype).itemsize
    LANE = 128
    SUB = max(8, 32 // itemsize)           # sublanes per vreg for this dtype
    TARGET_BLOCK_BYTES = 4 << 20           # ~4 MiB of real data per block

    Np = _round_up(N, SUB)
    Fp = _round_up(F, LANE)

    # TILE_F: largest 128-multiple divisor of Fp such that a SUB-row block
    # stays under the byte target (no ragged feature tiles).
    cap_f = max(1, TARGET_BLOCK_BYTES // (SUB * LANE * itemsize))
    tile_f = LANE * _largest_divisor(Fp // LANE, cap_f)
    # TILE_N: grow rows (multiple of SUB, divisor of Np) up to the byte target.
    cap_n = max(1, TARGET_BLOCK_BYTES // (tile_f * SUB * itemsize))
    tile_n = SUB * _largest_divisor(Np // SUB, cap_n)

    # Per-sample keep decision and scale, drawn once in the wrapper (f32).
    u = jax.random.uniform(key, (N,), dtype=jnp.float32)
    scale = jnp.where(u < jnp.float32(p), jnp.float32(1.0 / p), jnp.float32(0.0))
    scale_col = jnp.pad(scale, (0, Np - N)).reshape(Np, 1)

    x2 = x.reshape(N, F)
    if (Np, Fp) != (N, F):
        x2 = jnp.pad(x2, ((0, Np - N), (0, Fp - F)))

    grid = (Np // tile_n, Fp // tile_f)

    out2 = pl.pallas_call(
        _stochastic_depth_kernel,
        out_shape=jax.ShapeDtypeStruct((Np, Fp), x.dtype),
        grid=grid,
        in_specs=[
            pl.BlockSpec((tile_n, 1), lambda b, f: (b, 0)),
            pl.BlockSpec((tile_n, tile_f), lambda b, f: (b, f)),
        ],
        out_specs=pl.BlockSpec((tile_n, tile_f), lambda b, f: (b, f)),
        input_output_aliases={1: 0},          # output reuses x2's HBM buffer
        compiler_params=pltpu.CompilerParams(
            dimension_semantics=("parallel", "parallel"),
            vmem_limit_bytes=32 << 20),
    )(scale_col, x2)

    return out2[:N, :F].reshape(x.shape)


if __name__ == "__main__":
    root = jax.random.PRNGKey(0)
    data_key, drop_key = jax.random.split(root)

    N, C, H, W = 2, 4, 16, 16
    x = jax.random.normal(data_key, (N, C, H, W), dtype=jnp.float32)

    p = 0.8
    sd = jax.jit(stochastic_depth, static_argnames=("survival_prob", "training"))

    out = jax.block_until_ready(sd(x, drop_key, survival_prob=p, training=True))

    # Each sample must be exactly 0 or exactly x/p (per-sample broadcast).
    for b in range(N):
        is_zero = bool(jnp.all(out[b] == 0.0))
        is_scaled = bool(jnp.allclose(out[b], x[b] / p, rtol=1e-6, atol=1e-6))
        assert is_zero or is_scaled, f"sample {b}: not a valid stochastic-depth output"

    # Eval mode is the identity.
    out_eval = jax.block_until_ready(sd(x, drop_key, survival_prob=p, training=False))
    assert bool(jnp.array_equal(out_eval, x))

    print("KERNEL_OK")
</pallas_src>

<mosaic_0001>
module attributes {stable_mosaic.version = 11 : i64} {
  func.func @_stochastic_depth_kernel(%arg0: i32, %arg1: i32, %arg2: memref<8x1xf32, #tpu.memory_space<vmem>>, %arg3: memref<8x1024xf32, #tpu.memory_space<vmem>>, %arg4: memref<8x1024xf32, #tpu.memory_space<vmem>>) attributes {dimension_semantics = [#tpu.dimension_semantics<parallel>, #tpu.dimension_semantics<parallel>], iteration_bounds = array<i64: 1, 1>, scalar_prefetch = 0 : i64, scratch_operands = 0 : i64, tpu.core_type = #tpu.core_type<tc>, window_params = [{transform_indices = @transform_0, window_bounds = array<i64: 8, 1>}, {transform_indices = @transform_1, window_bounds = array<i64: 8, 1024>}, {transform_indices = @transform_2, window_bounds = array<i64: 8, 1024>}]} {
    %c0 = arith.constant 0 : index
    %c0_0 = arith.constant 0 : index
    %0 = vector.load %arg3[%c0, %c0_0] : memref<8x1024xf32, #tpu.memory_space<vmem>>, vector<8x1024xf32>
    %c0_1 = arith.constant 0 : index
    %c0_2 = arith.constant 0 : index
    %1 = vector.load %arg2[%c0_1, %c0_2] : memref<8x1xf32, #tpu.memory_space<vmem>>, vector<8x1xf32>
    %2 = vector.broadcast %1 : vector<8x1xf32> to vector<8x1024xf32>
    %3 = arith.mulf %0, %2 : vector<8x1024xf32>
    %c0_3 = arith.constant 0 : index
    %c0_4 = arith.constant 0 : index
    %4 = vector.load %arg4[%c0_3, %c0_4] : memref<8x1024xf32, #tpu.memory_space<vmem>>, vector<8x1024xf32>
    tpu.vector_store %arg4[%c0_3, %c0_4], %3 {strides = array<i32>} : memref<8x1024xf32, #tpu.memory_space<vmem>>, vector<8x1024xf32>,
    return
  }
  func.func @transform_0(%arg0: i32, %arg1: i32) -> (i32, i32) {
    %c0_i32 = arith.constant 0 : i32
    %c0_i32_0 = arith.constant 0 : i32
    return %arg0, %c0_i32 : i32, i32
  }
  func.func @transform_1(%arg0: i32, %arg1: i32) -> (i32, i32) {
    %c0_i32 = arith.constant 0 : i32
    return %arg0, %arg1 : i32, i32
  }
  func.func @transform_2(%arg0: i32, %arg1: i32) -> (i32, i32) {
    %c0_i32 = arith.constant 0 : i32
    return %arg0, %arg1 : i32, i32
  }
}

</mosaic_0001>

<llo_original>
// kernel: stochastic_depth.1
$region0: #{stochastic_depth.1}
  #allocation0 [shape = 'u32[]', space=smem, size = 0x4, offset = 0x4, fixed_abs, tag = 'smem constant byte address 0x4 - core index']
  #allocation1 [shape = 'u32[72,128]{1,0:T(1,128)}', space=vmem, size = 0x9000, scoped, tag = 'internal scratch']
  %s0 = inlined_call_operand.vmem [shape: f32[8,1], index: 0, kind: input, shape index: {}]
  %s1 = inlined_call_operand.vmem [shape: f32[8,1024], index: 1, kind: input, shape index: {}, may-alias: {1,2}]
  %s2 = inlined_call_operand.vmem [shape: f32[8,1024], index: 2, kind: output, shape index: {}, may-alias: {1,2}]
  %s3 = sld [smem:[#allocation0]]
  $region18: #{stochastic_depth.1} parent=0
    _
  %s5 = ssub.s32 1, %s3
  %s6 = scalar_select 0, %s5, %s3
  // Predicated region
  $region2: #{stochastic_depth.1} parent=0 // pred_check
    _
  $region3: #{stochastic_depth.1} parent=0 // pred_check_branch
    %8 = sbr.rel (0) target = $region5
  $region4: #{stochastic_depth.1} parent=0 // pred_region
    _
  $region5: #{stochastic_depth.1} parent=0 // pred_fallthru
    _
  // Predicated region
  $region6: #{stochastic_depth.1} parent=0 // pred_check
    _
  $region7: #{stochastic_depth.1} parent=0 // pred_check_branch
    %10 = sbr.rel (0) target = $region9
  $region8: #{stochastic_depth.1} parent=0 // pred_region
    _
  $region9: #{stochastic_depth.1} parent=0 // pred_fallthru
    _
  %v11 = vld [vmem:[%s1] sm:$0xff]
  %v12 = vld [vmem:[%s1 + $0x8] sm:$0xff]
  %v13 = vld [vmem:[%s1 + $0x10] sm:$0xff]
  %v14 = vld [vmem:[%s1 + $0x18] sm:$0xff]
  %v15 = vld [vmem:[%s1 + $0x20] sm:$0xff]
  %v16 = vld [vmem:[%s1 + $0x28] sm:$0xff]
  %v17 = vld [vmem:[%s1 + $0x30] sm:$0xff]
  %v18 = vld [vmem:[%s1 + $0x38] sm:$0xff]
  %v19 = vld [vmem:[%s0] sm:$0xff]
  %21 = vset.pattern.permute.xlu0 0
  %22 = vperm.xlu0 %21, %v19
  %v23 = vpop.permute.xlu0 %22
  %v25 = vmul.f32 %v11, %v23
  %v26 = vmul.f32 %v12, %v23
  %v27 = vmul.f32 %v13, %v23
  %v28 = vmul.f32 %v14, %v23
  %v29 = vmul.f32 %v15, %v23
  %v30 = vmul.f32 %v16, %v23
  %v31 = vmul.f32 %v17, %v23
  %v32 = vmul.f32 %v18, %v23
  %33 = vst [vmem:[%s2] sm:$0xff] %v25
  %34 = vst [vmem:[%s2 + $0x8] sm:$0xff] %v26
  %35 = vst [vmem:[%s2 + $0x10] sm:$0xff] %v27
  %36 = vst [vmem:[%s2 + $0x18] sm:$0xff] %v28
  %37 = vst [vmem:[%s2 + $0x20] sm:$0xff] %v29
  %38 = vst [vmem:[%s2 + $0x28] sm:$0xff] %v30
  %39 = vst [vmem:[%s2 + $0x30] sm:$0xff] %v31
  %40 = vst [vmem:[%s2 + $0x38] sm:$0xff] %v32
  // Predicated region
  $region10: #{stochastic_depth.1} parent=0 // pred_check
    _
  $region11: #{stochastic_depth.1} parent=0 // pred_check_branch
    %42 = sbr.rel (0) target = $region13
  $region12: #{stochastic_depth.1} parent=0 // pred_region
    _
  $region13: #{stochastic_depth.1} parent=0 // pred_fallthru
    _
  // Predicated region
  $region14: #{stochastic_depth.1} parent=0 // pred_check
    _
  $region15: #{stochastic_depth.1} parent=0 // pred_check_branch
    %44 = sbr.rel (0) target = $region17
  $region16: #{stochastic_depth.1} parent=0 // pred_region
    _
  $region17: #{stochastic_depth.1} parent=0 // pred_fallthru
    _

</llo_original>
